<compile_context>
chip_gen: v7x
topology: tpu7x:2x2x1
jax: 0.10.0
libtpu: 0.0.40
codegen_flags: <defaults>
</compile_context>

<pallas_src>
import math

import jax
import jax.numpy as jnp
from jax.experimental import pallas as pl
from jax.experimental.pallas import tpu as pltpu


_MIN_PALLAS_BYTES = 256 * 1024  # below this, plain XLA is faster than a kernel launch


def _smooth_kernel(x_ref, s_ref, o_ref):
    # Single VPU multiply in f32; scales (or 1/scales) are kept in f32 so low-precision
    # activations are not double-rounded.  Cast only the output.
    o_ref[...] = (x_ref[...].astype(jnp.float32) * s_ref[...]).astype(o_ref.dtype)


def _sublane_pack(dtype):
    # Rows per vreg for the dtype: f32 -> 8, bf16 -> 16, int8/fp8 -> 32.
    return {4: 8, 2: 16, 1: 32}.get(jnp.dtype(dtype).itemsize, 8)


_TPU_PARAMS_CACHE = None


def _tpu_params():
    """Query the chip once and derive tile budget / VMEM limit / core sharding."""
    global _TPU_PARAMS_CACHE
    if _TPU_PARAMS_CACHE is not None:
        return _TPU_PARAMS_CACHE

    vmem_bytes = 64 << 20  # conservative default = v7x per-TC VMEM
    num_tc = 1
    try:
        info = pltpu.get_tpu_info()
        vmem_bytes = int(getattr(info, "vmem_capacity_bytes", vmem_bytes))
        for name in ("num_tensorcores", "num_cores", "tensorcore_count"):
            val = getattr(info, name, None)
            if isinstance(val, int) and val > 0:
                num_tc = val
                break
    except Exception:
        pass
    try:
        kind = jax.devices()[0].device_kind.lower()
        if "v7" in kind or "7x" in kind:
            num_tc = max(num_tc, 2)
    except Exception:
        pass

    if vmem_bytes >= (100 << 20):
        # 128 MiB VMEM parts (v5e / v6e): bigger tiles, higher scoped limit.
        tile_budget, vmem_limit = 16 << 20, 96 << 20
    else:
        # v7x: 64 MiB per-TC VMEM; 2 in + 2 out buffered 8 MiB tiles stay well under it.
        tile_budget, vmem_limit = 8 << 20, 48 << 20

    # No point fragmenting into many grid steps on single-TC chips; on multi-TC chips
    # leave ~2 steps per core so the row axis can actually be sharded.
    min_grid_steps = 1 if num_tc <= 1 else 2 * num_tc

    _TPU_PARAMS_CACHE = dict(
        tile_budget_bytes=tile_budget,
        vmem_limit_bytes=vmem_limit,
        min_grid_steps=min_grid_steps,
        num_tensorcores=num_tc,
    )
    return _TPU_PARAMS_CACHE


def _plan_lane_fold(hidden, rows, target_lanes=2048):
    """Return (lane_mult, bulk_rows2d, tail_rows).

    `lane_mult` consecutive logical rows are folded into one lane-dense row of width
    lane_mult*hidden (a multiple of 128 whenever possible).  The first
    bulk_rows2d*lane_mult rows go through Pallas; the remaining tail_rows (< lane_mult)
    are handled by a tiny jnp epilogue so the bulk keeps unmasked lane-dense stores.
    """
    if hidden % 128 == 0:
        k = 1
        while hidden * (k * 2) <= target_lanes and rows % (k * 2) == 0:
            k *= 2
        return k, rows // k, 0
    k0 = 128 // math.gcd(hidden, 128)  # smallest fold making the row lane-dense
    if rows < k0:
        # Too few rows to fold: masked-lane fallback (array is tiny anyway).
        return 1, rows, 0
    tail = rows % k0
    bulk = rows - tail
    k = k0
    while hidden * (k * 2) <= target_lanes and bulk % (k * 2) == 0:
        k *= 2
    return k, bulk // k, tail


def _choose_tile_rows(rows, lane_width, dtype, *, tile_budget_bytes, min_grid_steps):
    """Largest sublane-aligned row tile under the per-tile VMEM budget, while leaving
    at least `min_grid_steps` grid steps when core-level parallelism exists."""
    sub = _sublane_pack(dtype)
    if rows <= sub:
        return rows  # block rows == full array rows (allowed)
    itemsize = jnp.dtype(dtype).itemsize
    cap_vmem = max(sub, (tile_budget_bytes // (lane_width * itemsize)) // sub * sub)
    cap_grid = rows if min_grid_steps <= 1 else max(sub, (rows // min_grid_steps) // sub * sub)
    cap_rows = max(sub, (rows // sub) * sub)
    return min(cap_vmem, cap_grid, cap_rows)


def _call_pallas(x2d, s2d, tile_rows, semantics, vmem_limit, alias_input):
    rows2d, lane_width = x2d.shape
    grid = (pl.cdiv(rows2d, tile_rows),)  # ragged row tail handled by Pallas edge masking
    extra = {}
    if alias_input:
        # Footprint optimization only: the kernel still reads and writes every byte.
        extra["input_output_aliases"] = {0: 0}
    return pl.pallas_call(
        _smooth_kernel,
        out_shape=jax.ShapeDtypeStruct((rows2d, lane_width), x2d.dtype),
        grid_spec=pltpu.PrefetchScalarGridSpec(
            num_scalar_prefetch=0,
            grid=grid,
            in_specs=[
                pl.BlockSpec((tile_rows, lane_width), lambda i: (i, 0)),
                pl.BlockSpec((1, lane_width), lambda i: (0, 0)),  # resident scales (f32)
            ],
            out_specs=pl.BlockSpec((tile_rows, lane_width), lambda i: (i, 0)),
        ),
        compiler_params=pltpu.CompilerParams(
            dimension_semantics=semantics,
            vmem_limit_bytes=vmem_limit,
        ),
        **extra,
    )(x2d, s2d)


def smooth_forward(x, scales=None, *, reverse=False, activated=True,
                   in_place=False, min_pallas_bytes=_MIN_PALLAS_BYTES):
    """Pallas implementation of SmoothModule.forward.

    x:      [..., hidden] activations (e.g. [batch, seq, hidden])
    scales: [hidden] per-channel smoothing scales (required when activated)
    """
    # TODO(synk): the torch.isnan(x) host-side assert is not reproduced inside the kernel.
    if not activated:
        return x

    orig_shape = x.shape
    hidden = orig_shape[-1]
    rows = x.size // hidden

    # Per-channel multiplier kept in f32: x / s == x * (1/s), reciprocal computed once.
    vec = scales.reshape(-1).astype(jnp.float32)
    if not reverse:
        vec = 1.0 / vec

    # Tiny-input fast path: kernel dispatch + DMA setup would dominate; let XLA fuse it.
    if x.size * jnp.dtype(x.dtype).itemsize < min_pallas_bytes:
        y = (x.reshape(rows, hidden).astype(jnp.float32) * vec).astype(x.dtype)
        return y.reshape(orig_shape)

    params = _tpu_params()

    lane_mult, bulk_rows2d, tail_rows = _plan_lane_fold(hidden, rows)
    lane_width = lane_mult * hidden
    rows_bulk = bulk_rows2d * lane_mult

    x_flat = x.reshape(rows, hidden)
    pieces = []

    if bulk_rows2d > 0:
        bulk_src = x_flat if tail_rows == 0 else x_flat[:rows_bulk]
        x2d = bulk_src.reshape(bulk_rows2d, lane_width)
        s2d = jnp.tile(vec, lane_mult).reshape(1, lane_width)

        tile_rows = _choose_tile_rows(
            bulk_rows2d, lane_width, x.dtype,
            tile_budget_bytes=params["tile_budget_bytes"],
            min_grid_steps=params["min_grid_steps"],
        )
        grid_steps = pl.cdiv(bulk_rows2d, tile_rows)

        # Actually shard the row axis across TensorCores on multi-TC chips (v7x);
        # plain "parallel" does not change codegen there.
        if params["num_tensorcores"] >= 2 and grid_steps >= params["num_tensorcores"]:
            semantics = (pltpu.CORE_PARALLEL,)
        else:
            semantics = ("parallel",)

        alias = in_place and tail_rows == 0
        try:
            out2d = _call_pallas(x2d, s2d, tile_rows, semantics,
                                 params["vmem_limit_bytes"], alias)
        except Exception:
            if semantics == ("parallel",):
                raise
            out2d = _call_pallas(x2d, s2d, tile_rows, ("parallel",),
                                 params["vmem_limit_bytes"], alias)
        pieces.append(out2d.reshape(rows_bulk, hidden))

    if tail_rows > 0:
        # TODO(synk): prefer padding rows to a multiple of the lane fold at the producer
        # so this epilogue (and the bulk prefix slice) disappears entirely.
        xt = x_flat[rows_bulk:]
        pieces.append((xt.astype(jnp.float32) * vec).astype(x.dtype))

    y = pieces[0] if len(pieces) == 1 else jnp.concatenate(pieces, axis=0)
    return y.reshape(orig_shape)


if __name__ == "__main__":
    key = jax.random.PRNGKey(0)
    kx, ks, kx2, ks2, kx3, ks3, kx4, ks4 = jax.random.split(key, 8)

    # 1) Small [batch, seq, hidden] f32 activations, non-lane-aligned hidden.
    batch, seq, hidden = 2, 8, 32
    x = jax.random.normal(kx, (batch, seq, hidden), dtype=jnp.float32)
    scales = jax.random.uniform(ks, (hidden,), dtype=jnp.float32, minval=0.5, maxval=2.0)

    y_identity = smooth_forward(x, scales, activated=False)       # not activated -> identity
    y_div_fast = smooth_forward(x, scales, reverse=False)         # tiny-input fast path
    y_div = smooth_forward(x, scales, reverse=False, min_pallas_bytes=0)   # forced kernel
    y_mul = smooth_forward(x, scales, reverse=True, min_pallas_bytes=0)    # x * scales
    jax.block_until_ready((y_identity, y_div_fast, y_div, y_mul))

    assert jnp.array_equal(y_identity, x)
    assert jnp.allclose(y_div_fast, x / scales, rtol=1e-5, atol=1e-6)
    assert jnp.allclose(y_div, x / scales, rtol=1e-5, atol=1e-6)
    assert jnp.allclose(y_mul, x * scales, rtol=1e-5, atol=1e-6)
    # Round trip div -> mul recovers x.
    y_rt = smooth_forward(y_div, scales, reverse=True, min_pallas_bytes=0)
    assert jnp.allclose(y_rt, x, rtol=1e-4, atol=1e-5)

    # 2) Ragged fold: hidden=48 (k0=8), rows=18 -> 16 bulk rows via Pallas + 2 tail rows via jnp.
    xr = jax.random.normal(kx3, (2, 9, 48), dtype=jnp.float32)
    sr = jax.random.uniform(ks3, (48,), dtype=jnp.float32, minval=0.5, maxval=2.0)
    yr = smooth_forward(xr, sr, reverse=False, min_pallas_bytes=0)
    jax.block_until_ready(yr)
    assert jnp.allclose(yr, xr / sr, rtol=1e-5, atol=1e-6)

    # 3) bf16, lane-aligned hidden (16-row sublane packing, f32 in-kernel compute).
    b2, s2, h2 = 2, 16, 128
    xb = jax.random.normal(kx2, (b2, s2, h2), dtype=jnp.bfloat16)
    sb = jax.random.uniform(ks2, (h2,), dtype=jnp.float32, minval=0.5, maxval=2.0)
    yb_div = smooth_forward(xb, sb, reverse=False, min_pallas_bytes=0)
    yb_mul = smooth_forward(xb, sb, reverse=True, min_pallas_bytes=0)
    jax.block_until_ready((yb_div, yb_mul))
    ref_div = xb.astype(jnp.float32) / sb
    ref_mul = xb.astype(jnp.float32) * sb
    assert jnp.allclose(yb_div.astype(jnp.float32), ref_div, rtol=2e-2, atol=2e-2)
    assert jnp.allclose(yb_mul.astype(jnp.float32), ref_mul, rtol=2e-2, atol=2e-2)

    # 4) Medium f32 case that exceeds the fast-path threshold (default code path).
    xm = jax.random.normal(kx4, (4, 64, 512), dtype=jnp.float32)
    sm = jax.random.uniform(ks4, (512,), dtype=jnp.float32, minval=0.5, maxval=2.0)
    ym = smooth_forward(xm, sm, reverse=False)
    jax.block_until_ready(ym)
    assert jnp.allclose(ym, xm / sm, rtol=1e-5, atol=1e-6)

    print("KERNEL_OK")
</pallas_src>

<mosaic_0001>
module attributes {stable_mosaic.version = 11 : i64} {
  func.func @_smooth_kernel(%arg0: i32, %arg1: memref<1x512xf32, #tpu.memory_space<vmem>>, %arg2: memref<1x512xf32, #tpu.memory_space<vmem>>, %arg3: memref<1x512xf32, #tpu.memory_space<vmem>>) attributes {dimension_semantics = [#tpu.dimension_semantics<parallel>], iteration_bounds = array<i64: 1>, scalar_prefetch = 0 : i64, scratch_operands = 0 : i64, tpu.core_type = #tpu.core_type<tc>, window_params = [{transform_indices = @transform_0, window_bounds = array<i64: 1, 512>}, {pipeline_mode = #tpu.pipeline_mode<synchronous>, transform_indices = @transform_1, window_bounds = array<i64: 1, 512>}, {transform_indices = @transform_2, window_bounds = array<i64: 1, 512>}]} {
    %c0 = arith.constant 0 : index
    %c0_0 = arith.constant 0 : index
    %0 = vector.load %arg1[%c0, %c0_0] : memref<1x512xf32, #tpu.memory_space<vmem>>, vector<1x512xf32>
    %c0_1 = arith.constant 0 : index
    %c0_2 = arith.constant 0 : index
    %1 = vector.load %arg2[%c0_1, %c0_2] : memref<1x512xf32, #tpu.memory_space<vmem>>, vector<1x512xf32>
    %2 = arith.mulf %0, %1 : vector<1x512xf32>
    %c0_3 = arith.constant 0 : index
    %c0_4 = arith.constant 0 : index
    %3 = vector.load %arg3[%c0_3, %c0_4] : memref<1x512xf32, #tpu.memory_space<vmem>>, vector<1x512xf32>
    tpu.vector_store %arg3[%c0_3, %c0_4], %2 {strides = array<i32>} : memref<1x512xf32, #tpu.memory_space<vmem>>, vector<1x512xf32>,
    return
  }
  func.func @transform_0(%arg0: i32) -> (i32, i32) {
    %c0_i32 = arith.constant 0 : i32
    %c0_i32_0 = arith.constant 0 : i32
    return %arg0, %c0_i32 : i32, i32
  }
  func.func @transform_1(%arg0: i32) -> (i32, i32) {
    %c0_i32 = arith.constant 0 : i32
    %c0_i32_0 = arith.constant 0 : i32
    %c0_i32_1 = arith.constant 0 : i32
    return %c0_i32, %c0_i32_0 : i32, i32
  }
  func.func @transform_2(%arg0: i32) -> (i32, i32) {
    %c0_i32 = arith.constant 0 : i32
    %c0_i32_0 = arith.constant 0 : i32
    return %arg0, %c0_i32 : i32, i32
  }
}

</mosaic_0001>

<llo_original>
// kernel: tpu_custom_call.1
$region0: #{tpu_custom_call.1}
  #allocation0 [shape = 'u32[]', space=smem, size = 0x4, offset = 0x4, fixed_abs, tag = 'smem constant byte address 0x4 - core index']
  #allocation1 [shape = 'u32[144,128]{1,0:T(1,128)}', space=vmem, size = 0x12000, scoped, tag = 'internal scratch']
  %s0 = inlined_call_operand.hbm [shape: f32[1,512], index: 0, kind: input, shape index: {}]
  %s1 = inlined_call_operand.hbm [shape: f32[1,512], index: 1, kind: input, shape index: {}]
  %s2 = inlined_call_operand.hbm [shape: f32[1,512], index: 2, kind: output, shape index: {}]
  %s3 = sld [smem:[#allocation0]]
  $region26: #{tpu_custom_call.1} parent=0
    _
  %s5 = ssub.s32 1, %s3
  %s6 = scalar_select 0, %s5, %s3
  $region1: #{tpu_custom_call.1} parent=0
    #allocation2 [shape = 'u8[2048]{0}', space=vmem, size = 0x800, scoped, tag = 'input window, operand 0, single buffered']
    #allocation3 [shape = 's32[1]{0}', space=sflag, size = 0x4, scoped, tag = 'scoped memory for tpu_custom_call.1']
    #allocation4 [shape = 's32[1]{0}', space=sflag, size = 0x4, scoped, tag = 'scoped memory for tpu_custom_call.1']
    #allocation5 [shape = 'u8[2048]{0}', space=vmem, size = 0x800, scoped, tag = 'input window, operand 1, single buffered']
    #allocation6 [shape = 's32[1]{0}', space=sflag, size = 0x4, scoped, tag = 'scoped memory for tpu_custom_call.1']
    #allocation7 [shape = 'u8[2048]{0}', space=vmem, size = 0x800, scoped, tag = 'output window, operand 0, single buffered']
    %7 = vsyncpa [#allocation3], 0
    %8 = vsyncpa [#allocation6], 0
    %9 = vsyncpa [#allocation4], 0
    // Predicated region
    $region2: #{tpu_custom_call.1} parent=1 // pred_check
      _
    $region3: #{tpu_custom_call.1} parent=1 // pred_check_branch
      %11 = sbr.rel (0) target = $region5
    $region4: #{tpu_custom_call.1} parent=1 // pred_region
      %s13 = ssub.s32 64, 64
      %14 = vsyncadd [#allocation3], %s13
      %s16 = sshll.u32 [#allocation2], 4
      %s17 = int_to_ptr.vmem [resolvable:$true] %s16
      %19 = dma.hbm_to_vmem [thread:$0]  %s0, 64, %s17, [#allocation3]
    $region5: #{tpu_custom_call.1} parent=1 // pred_fallthru
      _
    // Predicated region
    $region6: #{tpu_custom_call.1} parent=1 // pred_check
      _
    $region7: #{tpu_custom_call.1} parent=1 // pred_check_branch
      %21 = sbr.rel (0) target = $region9
    $region8: #{tpu_custom_call.1} parent=1 // pred_region
      %s23 = ssub.s32 64, 64
      %24 = vsyncadd [#allocation6], %s23
      %s26 = sshll.u32 [#allocation5], 4
      %s27 = int_to_ptr.vmem [resolvable:$true] %s26
      %29 = dma.hbm_to_vmem [thread:$0]  %s1, 64, %s27, [#allocation6]
    $region9: #{tpu_custom_call.1} parent=1 // pred_fallthru
      _
    // Predicated region
    $region10: #{tpu_custom_call.1} parent=1 // pred_check
      _
    $region11: #{tpu_custom_call.1} parent=1 // pred_check_branch
      %31 = sbr.rel (0) target = $region13
    $region12: #{tpu_custom_call.1} parent=1 // pred_region
      %32 = dma.done [#allocation3], 64
    $region13: #{tpu_custom_call.1} parent=1 // pred_fallthru
      _
    // Predicated region
    $region14: #{tpu_custom_call.1} parent=1 // pred_check
      _
    $region15: #{tpu_custom_call.1} parent=1 // pred_check_branch
      %34 = sbr.rel (0) target = $region17
    $region16: #{tpu_custom_call.1} parent=1 // pred_region
      %35 = dma.done [#allocation6], 64
    $region17: #{tpu_custom_call.1} parent=1 // pred_fallthru
      _
    %v36 = vld [vmem:[#allocation2] sm:$0xf]
    %v37 = vld [vmem:[#allocation5] sm:$0xf]
    %v38 = vmul.f32 %v36, %v37
    %v39 = vlaneseq
    %vm40 = vcmp.ge.s32.totalorder %v39, 0
    %vm41 = vcmp.lt.s32.totalorder %v39, 512
    %vm42 = vmand %vm40, %vm41
    %43 = vst.msk [vmem:[#allocation7] sm:$0xf] %vm42, %v38
    // Predicated region
    $region18: #{tpu_custom_call.1} parent=1 // pred_check
      _
    $region19: #{tpu_custom_call.1} parent=1 // pred_check_branch
      %45 = sbr.rel (0) target = $region21
    $region20: #{tpu_custom_call.1} parent=1 // pred_region
      %s47 = ssub.s32 64, 64
      %48 = vsyncadd [#allocation4], %s47
      %s50 = sshll.u32 [#allocation7], 4
      %s51 = int_to_ptr.vmem [resolvable:$true] %s50
      %53 = dma.vmem_to_hbm [thread:$0]  %s51, 64, %s2, [#allocation4]
    $region21: #{tpu_custom_call.1} parent=1 // pred_fallthru
      _
    // Predicated region
    $region22: #{tpu_custom_call.1} parent=1 // pred_check
      _
    $region23: #{tpu_custom_call.1} parent=1 // pred_check_branch
      %55 = sbr.rel (0) target = $region25
    $region24: #{tpu_custom_call.1} parent=1 // pred_region
      %56 = dma.done [#allocation4], 64
    $region25: #{tpu_custom_call.1} parent=1 // pred_fallthru
      _
    %57 = vsyncpa [#allocation3], 1
    %58 = vsyncpa [#allocation6], 1
    %59 = vsyncpa [#allocation4], 1

</llo_original>
